<compile_context>
chip_gen: v5e
topology: v5e:2x2
jax: 0.10.0
libtpu: 0.0.40
codegen_flags: <defaults>
</compile_context>

<pallas_src>
import functools
import math

import jax
import jax.numpy as jnp
from jax import lax
from jax.experimental import pallas as pl
from jax.experimental.pallas import tpu as pltpu


def _round_up(x, m):
    return (x + m - 1) // m * m


def _pick_tile(total, limit=512):
    """Largest multiple of 128 that divides `total` and is <= limit."""
    best = 128
    c = 128
    while c <= min(total, limit):
        if total % c == 0:
            best = c
        c += 128
    return best


# ----------------------------------------------------------------------------
# Kernel 1: S2GC precompute over one feature-column slab
#   emb[:, slab] = alpha*X[:, slab] + sum_k (1-alpha)/degree * (A^k X)[:, slab]
# ----------------------------------------------------------------------------
def _sgc_precompute_kernel(adj_ref, feat_ref, emb_ref, *, degree, alpha, use_bf16):
    adj = adj_ref[...]
    x = feat_ref[...].astype(jnp.float32)
    if use_bf16:
        # bf16 MXU operands, f32 accumulation.  Off by default: repeated bf16
        # hops can drift past a 1e-4 tolerance vs the f32 reference.
        adj = adj.astype(jnp.bfloat16)

    scale = (1.0 - alpha) / degree
    emb = alpha * x
    # `degree` is a small static hyperparameter: fully unroll at trace time so
    # the LLO scheduler sees the whole matmul chain.
    for _ in range(degree):
        rhs = x.astype(jnp.bfloat16) if use_bf16 else x
        x = jnp.dot(adj, rhs, preferred_element_type=jnp.float32)   # MXU
        emb = emb + scale * x                                        # f32 VPU
    emb_ref[...] = emb.astype(emb_ref.dtype)


def sgc_precompute(features, adj, degree, alpha, *, use_bf16=False):
    """Returns (emb_padded (Np, Fp) f32, N) with Np/Fp multiples of 128."""
    N, F = features.shape
    Np = _round_up(N, 128)          # MXU/sublane friendly row count
    Fp = _round_up(F, 128)          # lane-dense feature dim

    # Feature-slab width: must divide Fp; keep the double-buffered in/out
    # slabs within a few MiB so adj + slabs fit the scoped VMEM limit.
    slab_budget = 8 << 20                                     # per-slab bytes
    tf_limit = max(128, (slab_budget // (Np * 4)) // 128 * 128)
    tf = _pick_tile(Fp, min(512, tf_limit))

    adj_p = jnp.zeros((Np, Np), jnp.float32).at[:N, :N].set(adj.astype(jnp.float32))
    feat_p = jnp.zeros((Np, Fp), jnp.float32).at[:N, :F].set(
        features.astype(jnp.float32))

    grid = (Fp // tf,)

    # VMEM budget: resident adj block + double-buffered in/out slabs + carries.
    adj_bytes = Np * Np * 4
    slab_bytes = Np * tf * 4
    needed = 2 * adj_bytes + 4 * slab_bytes + 2 * slab_bytes
    vmem_limit = int(min(max(2 * needed, 16 << 20), 48 << 20))

    cost = pl.CostEstimate(
        flops=2 * degree * Np * Np * Fp,
        transcendentals=0,
        bytes_accessed=adj_bytes + 2 * Np * Fp * 4,
    )

    kernel = functools.partial(
        _sgc_precompute_kernel, degree=degree, alpha=alpha, use_bf16=use_bf16)

    emb_p = pl.pallas_call(
        kernel,
        out_shape=jax.ShapeDtypeStruct((Np, Fp), jnp.float32),
        grid_spec=pltpu.PrefetchScalarGridSpec(
            num_scalar_prefetch=0,
            grid=grid,
            in_specs=[
                pl.BlockSpec((Np, Np), lambda j: (0, 0)),   # adj stays resident
                pl.BlockSpec((Np, tf), lambda j: (0, j)),   # feature slab
            ],
            out_specs=pl.BlockSpec((Np, tf), lambda j: (0, j)),
        ),
        compiler_params=pltpu.CompilerParams(
            dimension_semantics=("parallel",),
            vmem_limit_bytes=vmem_limit,
        ),
        cost_estimate=cost,
    )(adj_p, feat_p)
    return emb_p, N


# ----------------------------------------------------------------------------
# Kernel 2: fused Linear + log_softmax over classes (dim=1), lane-dense output
# Padded class lanes are neutralized in the *bias* (-1e30, with zero weight
# columns) so the kernel needs no per-tile masking.
# ----------------------------------------------------------------------------
def _linear_logsoftmax_kernel(feat_ref, w_ref, b_ref, out_ref):
    feat = feat_ref[...]                              # (tm, Fp) f32
    w = w_ref[...]                                    # (Fp, Cp) f32
    b = b_ref[...]                                    # (1, Cp) f32

    logits = jnp.dot(feat, w, preferred_element_type=jnp.float32) + b

    # Numerically stable log_softmax along the class (lane) axis.
    m = jnp.max(logits, axis=-1, keepdims=True)
    shifted = logits - m
    lse = jnp.log(jnp.sum(jnp.exp(shifted), axis=-1, keepdims=True))
    out_ref[...] = (shifted - lse).astype(out_ref.dtype)


def linear_logsoftmax(feat_p, w_t, bias, n_rows):
    Np, Fp = feat_p.shape
    F, C = w_t.shape
    Cp = _round_up(C, 128)          # lane-dense output

    # Row-tile: largest 128-multiple divisor of Np whose double-buffered
    # feature block stays within ~8 MiB.
    row_budget = 8 << 20
    tm_limit = max(128, (row_budget // (Fp * 4)) // 128 * 128)
    tm = _pick_tile(Np, min(512, tm_limit))

    w_p = jnp.zeros((Fp, Cp), jnp.float32).at[:F, :C].set(w_t.astype(jnp.float32))
    # Padded class lanes get -1e30 so they vanish from the softmax; their
    # weight columns are zero so the matmul contributes nothing there.
    b_p = jnp.full((1, Cp), -1e30, jnp.float32).at[0, :C].set(
        bias.astype(jnp.float32))

    grid = (Np // tm,)

    needed = 2 * (tm * Fp * 4 + Fp * Cp * 4 + Cp * 4 + tm * Cp * 4)
    vmem_limit = int(min(max(2 * needed, 16 << 20), 48 << 20))

    cost = pl.CostEstimate(
        flops=2 * Np * Fp * Cp,
        transcendentals=Np * Cp,
        bytes_accessed=Np * Fp * 4 + Fp * Cp * 4 + Np * Cp * 4,
    )

    out_p = pl.pallas_call(
        _linear_logsoftmax_kernel,
        out_shape=jax.ShapeDtypeStruct((Np, Cp), jnp.float32),
        grid_spec=pltpu.PrefetchScalarGridSpec(
            num_scalar_prefetch=0,
            grid=grid,
            in_specs=[
                pl.BlockSpec((tm, Fp), lambda i: (i, 0)),   # row tile of emb
                pl.BlockSpec((Fp, Cp), lambda i: (0, 0)),   # weights resident
                pl.BlockSpec((1, Cp), lambda i: (0, 0)),    # bias resident
            ],
            out_specs=pl.BlockSpec((tm, Cp), lambda i: (i, 0)),
        ),
        compiler_params=pltpu.CompilerParams(
            dimension_semantics=("parallel",),
            vmem_limit_bytes=vmem_limit,
        ),
        cost_estimate=cost,
    )(feat_p, w_p, b_p)
    return out_p[:n_rows, :C]


# ----------------------------------------------------------------------------
# S2GC module equivalent
# ----------------------------------------------------------------------------
class S2GC:
    def __init__(self, nfeat, nclass, features, adj, degree, alpha, key):
        kw, kb = jax.random.split(key)
        bound = 1.0 / math.sqrt(nfeat)
        self.nfeat = nfeat
        self.nclass = nclass
        # deterministic "Linear" init (Kaiming-uniform-ish bounds like torch)
        self.w_t = jax.random.uniform(kw, (nfeat, nclass), jnp.float32, -bound, bound)
        self.bias = jax.random.uniform(kb, (nclass,), jnp.float32, -bound, bound)
        # precompute propagated features with the Pallas kernel
        # (stored padded & lane-dense; handed straight to the linear kernel)
        self.feat_p, self.n_nodes = sgc_precompute(features, adj, degree, alpha)

    def __call__(self):
        return linear_logsoftmax(self.feat_p, self.w_t, self.bias, self.n_nodes)


# ----------------------------------------------------------------------------
# Pure-JAX reference for validation
# ----------------------------------------------------------------------------
def s2gc_ref(features, adj, degree, alpha, w_t, bias):
    emb = alpha * features
    x = features
    for _ in range(degree):
        x = adj @ x
        emb = emb + (1.0 - alpha) * x / degree
    logits = emb @ w_t + bias
    return jax.nn.log_softmax(logits, axis=1)


if __name__ == "__main__":
    key = jax.random.PRNGKey(0)
    k_feat, k_adj, k_params = jax.random.split(key, 3)

    N, nfeat, nclass = 64, 32, 8
    degree, alpha = 3, 0.05

    features = jax.random.normal(k_feat, (N, nfeat), jnp.float32)
    # simple symmetric, row-normalized-ish dense adjacency
    a = jax.random.uniform(k_adj, (N, N), jnp.float32)
    a = (a + a.T) * 0.5
    adj = a / jnp.sum(a, axis=1, keepdims=True)

    model = S2GC(nfeat, nclass, features, adj, degree, alpha, k_params)
    out = model()
    out = jax.block_until_ready(out)

    ref = s2gc_ref(features, adj, degree, alpha, model.w_t, model.bias)
    assert out.shape == (N, nclass)
    assert jnp.allclose(out, ref, atol=1e-4, rtol=1e-4), (
        f"max abs err = {jnp.max(jnp.abs(out - ref))}"
    )
    print("KERNEL_OK")
</pallas_src>

<mosaic_0001>
module attributes {stable_mosaic.version = 11 : i64} {
  func.func @_sgc_precompute_kernel(%arg0: i32, %arg1: memref<128x128xf32, #tpu.memory_space<vmem>>, %arg2: memref<128x128xf32, #tpu.memory_space<vmem>>, %arg3: memref<128x128xf32, #tpu.memory_space<vmem>>) attributes {dimension_semantics = [#tpu.dimension_semantics<parallel>], iteration_bounds = array<i64: 1>, scalar_prefetch = 0 : i64, scratch_operands = 0 : i64, tpu.core_type = #tpu.core_type<tc>, window_params = [{pipeline_mode = #tpu.pipeline_mode<synchronous>, transform_indices = @transform_0, window_bounds = array<i64: 128, 128>}, {transform_indices = @transform_1, window_bounds = array<i64: 128, 128>}, {transform_indices = @transform_2, window_bounds = array<i64: 128, 128>}]} {
    %c0 = arith.constant 0 : index
    %c0_0 = arith.constant 0 : index
    %0 = vector.load %arg1[%c0, %c0_0] : memref<128x128xf32, #tpu.memory_space<vmem>>, vector<128x128xf32>
    %c0_1 = arith.constant 0 : index
    %c0_2 = arith.constant 0 : index
    %1 = vector.load %arg2[%c0_1, %c0_2] : memref<128x128xf32, #tpu.memory_space<vmem>>, vector<128x128xf32>
    %cst = arith.constant 5.000000e-02 : f32
    %2 = vector.broadcast %cst : f32 to vector<128x128xf32>
    %3 = arith.mulf %2, %1 : vector<128x128xf32>
    %cst_3 = arith.constant dense<0.000000e+00> : vector<128x128xf32>
    %4 = tpu.matmul %0, %1, %cst_3 {dimension_numbers = #tpu.dot_dimension_numbers<[1], [0], [0], [1], [0, 0, 1, 1], [], []>} : vector<128x128xf32>, vector<128x128xf32>, vector<128x128xf32> -> vector<128x128xf32>
    %cst_4 = arith.constant 0.316666663 : f32
    %5 = vector.broadcast %cst_4 : f32 to vector<128x128xf32>
    %6 = arith.mulf %5, %4 : vector<128x128xf32>
    %7 = arith.addf %3, %6 : vector<128x128xf32>
    %cst_5 = arith.constant dense<0.000000e+00> : vector<128x128xf32>
    %8 = tpu.matmul %0, %4, %cst_5 {dimension_numbers = #tpu.dot_dimension_numbers<[1], [0], [0], [1], [0, 0, 1, 1], [], []>} : vector<128x128xf32>, vector<128x128xf32>, vector<128x128xf32> -> vector<128x128xf32>
    %cst_6 = arith.constant 0.316666663 : f32
    %9 = vector.broadcast %cst_6 : f32 to vector<128x128xf32>
    %10 = arith.mulf %9, %8 : vector<128x128xf32>
    %11 = arith.addf %7, %10 : vector<128x128xf32>
    %cst_7 = arith.constant dense<0.000000e+00> : vector<128x128xf32>
    %12 = tpu.matmul %0, %8, %cst_7 {dimension_numbers = #tpu.dot_dimension_numbers<[1], [0], [0], [1], [0, 0, 1, 1], [], []>} : vector<128x128xf32>, vector<128x128xf32>, vector<128x128xf32> -> vector<128x128xf32>
    %cst_8 = arith.constant 0.316666663 : f32
    %13 = vector.broadcast %cst_8 : f32 to vector<128x128xf32>
    %14 = arith.mulf %13, %12 : vector<128x128xf32>
    %15 = arith.addf %11, %14 : vector<128x128xf32>
    %c0_9 = arith.constant 0 : index
    %c0_10 = arith.constant 0 : index
    %16 = vector.load %arg3[%c0_9, %c0_10] : memref<128x128xf32, #tpu.memory_space<vmem>>, vector<128x128xf32>
    tpu.vector_store %arg3[%c0_9, %c0_10], %15 {strides = array<i32>} : memref<128x128xf32, #tpu.memory_space<vmem>>, vector<128x128xf32>,
    return
  }
  func.func @transform_0(%arg0: i32) -> (i32, i32) {
    %c0_i32 = arith.constant 0 : i32
    %c0_i32_0 = arith.constant 0 : i32
    %c0_i32_1 = arith.constant 0 : i32
    return %c0_i32, %c0_i32_0 : i32, i32
  }
  func.func @transform_1(%arg0: i32) -> (i32, i32) {
    %c0_i32 = arith.constant 0 : i32
    %c0_i32_0 = arith.constant 0 : i32
    return %c0_i32, %arg0 : i32, i32
  }
  func.func @transform_2(%arg0: i32) -> (i32, i32) {
    %c0_i32 = arith.constant 0 : i32
    %c0_i32_0 = arith.constant 0 : i32
    return %c0_i32, %arg0 : i32, i32
  }
}

</mosaic_0001>

<llo_original>
// kernel: tpu_custom_call.1
$region0: #{tpu_custom_call.1}
  #allocation0 [shape = 'u32[]', space=smem, size = 0x4, offset = 0x4, fixed_abs, tag = 'smem constant byte address 0x4 - core index']
  #allocation1 [shape = 'u32[72,128]{1,0:T(1,128)}', space=vmem, size = 0x9000, scoped, tag = 'internal scratch']
  %s0 = inlined_call_operand.hbm [shape: f32[128,128], index: 0, kind: input, shape index: {}]
  %s1 = inlined_call_operand.hbm [shape: f32[128,128], index: 1, kind: input, shape index: {}]
  %s2 = inlined_call_operand.hbm [shape: f32[128,128], index: 2, kind: output, shape index: {}]
  %s3 = sld [smem:[#allocation0]]
  $region26: #{tpu_custom_call.1} parent=0
    _
  %s5 = ssub.s32 1, %s3
  %s6 = scalar_select 0, %s5, %s3
  $region1: #{tpu_custom_call.1} parent=0
    #allocation2 [shape = 'u8[65536]{0}', space=vmem, size = 0x10000, scoped, tag = 'input window, operand 0, single buffered']
    #allocation3 [shape = 's32[1]{0}', space=sflag, size = 0x4, scoped, tag = 'scoped memory for tpu_custom_call.1']
    #allocation4 [shape = 's32[1]{0}', space=sflag, size = 0x4, scoped, tag = 'scoped memory for tpu_custom_call.1']
    #allocation5 [shape = 'u8[65536]{0}', space=vmem, size = 0x10000, scoped, tag = 'input window, operand 1, single buffered']
    #allocation6 [shape = 's32[1]{0}', space=sflag, size = 0x4, scoped, tag = 'scoped memory for tpu_custom_call.1']
    #allocation7 [shape = 'u8[65536]{0}', space=vmem, size = 0x10000, scoped, tag = 'output window, operand 0, single buffered']
    %7 = vsyncpa [#allocation3], 0
    %8 = vsyncpa [#allocation6], 0
    %9 = vsyncpa [#allocation4], 0
    // Predicated region
    $region2: #{tpu_custom_call.1} parent=1 // pred_check
      _
    $region3: #{tpu_custom_call.1} parent=1 // pred_check_branch
      %11 = sbr.rel (0) target = $region5
    $region4: #{tpu_custom_call.1} parent=1 // pred_region
      %13 = vsyncadd [#allocation3], 0
      %s14 = sshll.u32 %s0, 4
      %s15 = int_to_ptr.hbm [resolvable:$true] %s14
      %s16 = sshll.u32 [#allocation2], 4
      %s17 = int_to_ptr.vmem [resolvable:$true] %s16
      %22 = dma.hbm_to_vmem [thread:$0]  %s15, 2048, %s17, [#allocation3], 128, 128, 8
    $region5: #{tpu_custom_call.1} parent=1 // pred_fallthru
      _
    // Predicated region
    $region6: #{tpu_custom_call.1} parent=1 // pred_check
      _
    $region7: #{tpu_custom_call.1} parent=1 // pred_check_branch
      %24 = sbr.rel (0) target = $region9
    $region8: #{tpu_custom_call.1} parent=1 // pred_region
      %26 = vsyncadd [#allocation6], 0
      %s27 = sshll.u32 %s1, 4
      %s28 = int_to_ptr.hbm [resolvable:$true] %s27
      %s29 = sshll.u32 [#allocation5], 4
      %s30 = int_to_ptr.vmem [resolvable:$true] %s29
      %35 = dma.hbm_to_vmem [thread:$0]  %s28, 2048, %s30, [#allocation6], 128, 128, 8
    $region9: #{tpu_custom_call.1} parent=1 // pred_fallthru
      _
    // Predicated region
    $region10: #{tpu_custom_call.1} parent=1 // pred_check
      _
    $region11: #{tpu_custom_call.1} parent=1 // pred_check_branch
      %37 = sbr.rel (0) target = $region13
    $region12: #{tpu_custom_call.1} parent=1 // pred_region
      %39 = dma.done [#allocation3], 2048
    $region13: #{tpu_custom_call.1} parent=1 // pred_fallthru
      _
    // Predicated region
    $region14: #{tpu_custom_call.1} parent=1 // pred_check
      _
    $region15: #{tpu_custom_call.1} parent=1 // pred_check_branch
      %41 = sbr.rel (0) target = $region17
    $region16: #{tpu_custom_call.1} parent=1 // pred_region
      %43 = dma.done [#allocation6], 2048
    $region17: #{tpu_custom_call.1} parent=1 // pred_fallthru
      _
    %v44 = vld [vmem:[#allocation2] sm:$0xff]
    %v45 = vld [vmem:[#allocation2 + $0x8] sm:$0xff]
    %v46 = vld [vmem:[#allocation2 + $0x10] sm:$0xff]
    %v47 = vld [vmem:[#allocation2 + $0x18] sm:$0xff]
    %v48 = vld [vmem:[#allocation2 + $0x20] sm:$0xff]
    %v49 = vld [vmem:[#allocation2 + $0x28] sm:$0xff]
    %v50 = vld [vmem:[#allocation2 + $0x30] sm:$0xff]
    %v51 = vld [vmem:[#allocation2 + $0x38] sm:$0xff]
    %v52 = vld [vmem:[#allocation2 + $0x40] sm:$0xff]
    %v53 = vld [vmem:[#allocation2 + $0x48] sm:$0xff]
    %v54 = vld [vmem:[#allocation2 + $0x50] sm:$0xff]
    %v55 = vld [vmem:[#allocation2 + $0x58] sm:$0xff]
    %v56 = vld [vmem:[#allocation2 + $0x60] sm:$0xff]
    %v57 = vld [vmem:[#allocation2 + $0x68] sm:$0xff]
    %v58 = vld [vmem:[#allocation2 + $0x70] sm:$0xff]
    %v59 = vld [vmem:[#allocation2 + $0x78] sm:$0xff]
    %v60 = vld [vmem:[#allocation5] sm:$0xff]
    %v61 = vld [vmem:[#allocation5 + $0x8] sm:$0xff]
    %v62 = vld [vmem:[#allocation5 + $0x10] sm:$0xff]
    %v63 = vld [vmem:[#allocation5 + $0x18] sm:$0xff]
    %v64 = vld [vmem:[#allocation5 + $0x20] sm:$0xff]
    %v65 = vld [vmem:[#allocation5 + $0x28] sm:$0xff]
    %v66 = vld [vmem:[#allocation5 + $0x30] sm:$0xff]
    %v67 = vld [vmem:[#allocation5 + $0x38] sm:$0xff]
    %v68 = vld [vmem:[#allocation5 + $0x40] sm:$0xff]
    %v69 = vld [vmem:[#allocation5 + $0x48] sm:$0xff]
    %v70 = vld [vmem:[#allocation5 + $0x50] sm:$0xff]
    %v71 = vld [vmem:[#allocation5 + $0x58] sm:$0xff]
    %v72 = vld [vmem:[#allocation5 + $0x60] sm:$0xff]
    %v73 = vld [vmem:[#allocation5 + $0x68] sm:$0xff]
    %v74 = vld [vmem:[#allocation5 + $0x70] sm:$0xff]
    %v75 = vld [vmem:[#allocation5 + $0x78] sm:$0xff]
    %v76 = vmul.f32 %v60, 0.05
    %v77 = vmul.f32 %v61, 0.05
    %v78 = vmul.f32 %v62, 0.05
    %v79 = vmul.f32 %v63, 0.05
    %v80 = vmul.f32 %v64, 0.05
    %v81 = vmul.f32 %v65, 0.05
    %v82 = vmul.f32 %v66, 0.05
    %v83 = vmul.f32 %v67, 0.05
    %v84 = vmul.f32 %v68, 0.05
    %v85 = vmul.f32 %v69, 0.05
    %v86 = vmul.f32 %v70, 0.05
    %v87 = vmul.f32 %v71, 0.05
    %v88 = vmul.f32 %v72, 0.05
    %v89 = vmul.f32 %v73, 0.05
    %v90 = vmul.f32 %v74, 0.05
    %v91 = vmul.f32 %v75, 0.05
    %92 = vmatpush.msra.mxu0 %v75
    %93 = vmatpush.msra.mxu0 %v74
    %94 = vmatpush.msra.mxu0 %v73
    %95 = vmatpush.msra.mxu0 %v72
    %96 = vmatpush.msra.mxu0 %v71
    %97 = vmatpush.msra.mxu0 %v70
    %98 = vmatpush.msra.mxu0 %v69
    %99 = vmatpush.msra.mxu0 %v68
    %100 = vmatpush.msra.mxu0 %v67
    %101 = vmatpush.msra.mxu0 %v66
    %102 = vmatpush.msra.mxu0 %v65
    %103 = vmatpush.msra.mxu0 %v64
    %104 = vmatpush.msra.mxu0 %v63
    %105 = vmatpush.msra.mxu0 %v62
    %106 = vmatpush.msra.mxu0 %v61
    %107 = vmatpush.msra.mxu0 %v60
    %108 = vmatmul.f32.gmra.mxu0 %v44
    %v109 = vpop.f32.mrf.mxu0
    %v110 = vadd.f32 0.0, %v109
    %111 = vmatmul.f32.gmra.mxu0 %v45
    %v112 = vpop.f32.mrf.mxu0
    %v113 = vadd.f32 0.0, %v112
    %114 = vmatmul.f32.gmra.mxu0 %v46
    %v115 = vpop.f32.mrf.mxu0
    %v116 = vadd.f32 0.0, %v115
    %117 = vmatmul.f32.gmra.mxu0 %v47
    %v118 = vpop.f32.mrf.mxu0
    %v119 = vadd.f32 0.0, %v118
    %120 = vmatmul.f32.gmra.mxu0 %v48
    %v121 = vpop.f32.mrf.mxu0
    %v122 = vadd.f32 0.0, %v121
    %123 = vmatmul.f32.gmra.mxu0 %v49
    %v124 = vpop.f32.mrf.mxu0
    %v125 = vadd.f32 0.0, %v124
    %126 = vmatmul.f32.gmra.mxu0 %v50
    %v127 = vpop.f32.mrf.mxu0
    %v128 = vadd.f32 0.0, %v127
    %129 = vmatmul.f32.gmra.mxu0 %v51
    %v130 = vpop.f32.mrf.mxu0
    %v131 = vadd.f32 0.0, %v130
    %132 = vmatmul.f32.gmra.mxu0 %v52
    %v133 = vpop.f32.mrf.mxu0
    %v134 = vadd.f32 0.0, %v133
    %135 = vmatmul.f32.gmra.mxu0 %v53
    %v136 = vpop.f32.mrf.mxu0
    %v137 = vadd.f32 0.0, %v136
    %138 = vmatmul.f32.gmra.mxu0 %v54
    %v139 = vpop.f32.mrf.mxu0
    %v140 = vadd.f32 0.0, %v139
    %141 = vmatmul.f32.gmra.mxu0 %v55
    %v142 = vpop.f32.mrf.mxu0
    %v143 = vadd.f32 0.0, %v142
    %144 = vmatmul.f32.gmra.mxu0 %v56
    %v145 = vpop.f32.mrf.mxu0
    %v146 = vadd.f32 0.0, %v145
    %147 = vmatmul.f32.gmra.mxu0 %v57
    %v148 = vpop.f32.mrf.mxu0
    %v149 = vadd.f32 0.0, %v148
    %150 = vmatmul.f32.gmra.mxu0 %v58
    %v151 = vpop.f32.mrf.mxu0
    %v152 = vadd.f32 0.0, %v151
    %153 = vmatmul.f32.gmra.mxu0 %v59
    %v154 = vpop.f32.mrf.mxu0
    %v155 = vadd.f32 0.0, %v154
    %156 = vdwg.mxu0
    %v157 = vmul.f32 %v110, 0.31666666
    %v158 = vmul.f32 %v113, 0.31666666
    %v159 = vmul.f32 %v116, 0.31666666
    %v160 = vmul.f32 %v119, 0.31666666
    %v161 = vmul.f32 %v122, 0.31666666
    %v162 = vmul.f32 %v125, 0.31666666
    %v163 = vmul.f32 %v128, 0.31666666
    %v164 = vmul.f32 %v131, 0.31666666
    %v165 = vmul.f32 %v134, 0.31666666
    %v166 = vmul.f32 %v137, 0.31666666
    %v167 = vmul.f32 %v140, 0.31666666
    %v168 = vmul.f32 %v143, 0.31666666
    %v169 = vmul.f32 %v146, 0.31666666
    %v170 = vmul.f32 %v149, 0.31666666
    %v171 = vmul.f32 %v152, 0.31666666
    %v172 = vmul.f32 %v155, 0.31666666
    %v173 = vadd.f32 %v76, %v157
    %v174 = vadd.f32 %v77, %v158
    %v175 = vadd.f32 %v78, %v159
    %v176 = vadd.f32 %v79, %v160
    %v177 = vadd.f32 %v80, %v161
    %v178 = vadd.f32 %v81, %v162
    %v179 = vadd.f32 %v82, %v163
    %v180 = vadd.f32 %v83, %v164
    %v181 = vadd.f32 %v84, %v165
    %v182 = vadd.f32 %v85, %v166
    %v183 = vadd.f32 %v86, %v167
    %v184 = vadd.f32 %v87, %v168
    %v185 = vadd.f32 %v88, %v169
    %v186 = vadd.f32 %v89, %v170
    %v187 = vadd.f32 %v90, %v171
    %v188 = vadd.f32 %v91, %v172
    %189 = vmatpush.msra.mxu0 %v155
    %190 = vmatpush.msra.mxu0 %v152
    %191 = vmatpush.msra.mxu0 %v149
    %192 = vmatpush.msra.mxu0 %v146
    %193 = vmatpush.msra.mxu0 %v143
    %194 = vmatpush.msra.mxu0 %v140
    %195 = vmatpush.msra.mxu0 %v137
    %196 = vmatpush.msra.mxu0 %v134
    %197 = vmatpush.msra.mxu0 %v131
    %198 = vmatpush.msra.mxu0 %v128
    %199 = vmatpush.msra.mxu0 %v125
    %200 = vmatpush.msra.mxu0 %v122
    %201 = vmatpush.msra.mxu0 %v119
    %202 = vmatpush.msra.mxu0 %v116
    %203 = vmatpush.msra.mxu0 %v113
    %204 = vmatpush.msra.mxu0 %v110
    %205 = vmatmul.f32.gmra.mxu0 %v44
    %v206 = vpop.f32.mrf.mxu0
    %v207 = vadd.f32 0.0, %v206
    %208 = vmatmul.f32.gmra.mxu0 %v45
    %v209 = vpop.f32.mrf.mxu0
    %v210 = vadd.f32 0.0, %v209
    %211 = vmatmul.f32.gmra.mxu0 %v46
    %v212 = vpop.f32.mrf.mxu0
    %v213 = vadd.f32 0.0, %v212
    %214 = vmatmul.f32.gmra.mxu0 %v47
    %v215 = vpop.f32.mrf.mxu0
    %v216 = vadd.f32 0.0, %v215
    %217 = vmatmul.f32.gmra.mxu0 %v48
    %v218 = vpop.f32.mrf.mxu0
    %v219 = vadd.f32 0.0, %v218
    %220 = vmatmul.f32.gmra.mxu0 %v49
    %v221 = vpop.f32.mrf.mxu0
    %v222 = vadd.f32 0.0, %v221
    %223 = vmatmul.f32.gmra.mxu0 %v50
    %v224 = vpop.f32.mrf.mxu0
    %v225 = vadd.f32 0.0, %v224
    %226 = vmatmul.f32.gmra.mxu0 %v51
    %v227 = vpop.f32.mrf.mxu0
    %v228 = vadd.f32 0.0, %v227
    %229 = vmatmul.f32.gmra.mxu0 %v52
    %v230 = vpop.f32.mrf.mxu0
    %v231 = vadd.f32 0.0, %v230
    %232 = vmatmul.f32.gmra.mxu0 %v53
    %v233 = vpop.f32.mrf.mxu0
    %v234 = vadd.f32 0.0, %v233
    %235 = vmatmul.f32.gmra.mxu0 %v54
    %v236 = vpop.f32.mrf.mxu0
    %v237 = vadd.f32 0.0, %v236
    %238 = vmatmul.f32.gmra.mxu0 %v55
    %v239 = vpop.f32.mrf.mxu0
    %v240 = vadd.f32 0.0, %v239
    %241 = vmatmul.f32.gmra.mxu0 %v56
    %v242 = vpop.f32.mrf.mxu0
    %v243 = vadd.f32 0.0, %v242
    %244 = vmatmul.f32.gmra.mxu0 %v57
    %v245 = vpop.f32.mrf.mxu0
    %v246 = vadd.f32 0.0, %v245
    %247 = vmatmul.f32.gmra.mxu0 %v58
    %v248 = vpop.f32.mrf.mxu0
    %v249 = vadd.f32 0.0, %v248
    %250 = vmatmul.f32.gmra.mxu0 %v59
    %v251 = vpop.f32.mrf.mxu0
    %v252 = vadd.f32 0.0, %v251
    %253 = vdwg.mxu0
    %v254 = vmul.f32 %v207, 0.31666666
    %v255 = vmul.f32 %v210, 0.31666666
    %v256 = vmul.f32 %v213, 0.31666666
    %v257 = vmul.f32 %v216, 0.31666666
    %v258 = vmul.f32 %v219, 0.31666666
    %v259 = vmul.f32 %v222, 0.31666666
    %v260 = vmul.f32 %v225, 0.31666666
    %v261 = vmul.f32 %v228, 0.31666666
    %v262 = vmul.f32 %v231, 0.31666666
    %v263 = vmul.f32 %v234, 0.31666666
    %v264 = vmul.f32 %v237, 0.31666666
    %v265 = vmul.f32 %v240, 0.31666666
    %v266 = vmul.f32 %v243, 0.31666666
    %v267 = vmul.f32 %v246, 0.31666666
    %v268 = vmul.f32 %v249, 0.31666666
    %v269 = vmul.f32 %v252, 0.31666666
    %v270 = vadd.f32 %v173, %v254
    %v271 = vadd.f32 %v174, %v255
    %v272 = vadd.f32 %v175, %v256
    %v273 = vadd.f32 %v176, %v257
    %v274 = vadd.f32 %v177, %v258
    %v275 = vadd.f32 %v178, %v259
    %v276 = vadd.f32 %v179, %v260
    %v277 = vadd.f32 %v180, %v261
    %v278 = vadd.f32 %v181, %v262
    %v279 = vadd.f32 %v182, %v263
    %v280 = vadd.f32 %v183, %v264
    %v281 = vadd.f32 %v184, %v265
    %v282 = vadd.f32 %v185, %v266
    %v283 = vadd.f32 %v186, %v267
    %v284 = vadd.f32 %v187, %v268
    %v285 = vadd.f32 %v188, %v269
    %286 = vmatpush.msra.mxu0 %v252
    %287 = vmatpush.msra.mxu0 %v249
    %288 = vmatpush.msra.mxu0 %v246
    %289 = vmatpush.msra.mxu0 %v243
    %290 = vmatpush.msra.mxu0 %v240
    %291 = vmatpush.msra.mxu0 %v237
    %292 = vmatpush.msra.mxu0 %v234
    %293 = vmatpush.msra.mxu0 %v231
    %294 = vmatpush.msra.mxu0 %v228
    %295 = vmatpush.msra.mxu0 %v225
    %296 = vmatpush.msra.mxu0 %v222
    %297 = vmatpush.msra.mxu0 %v219
    %298 = vmatpush.msra.mxu0 %v216
    %299 = vmatpush.msra.mxu0 %v213
    %300 = vmatpush.msra.mxu0 %v210
    %301 = vmatpush.msra.mxu0 %v207
    %302 = vmatmul.f32.gmra.mxu0 %v44
    %v303 = vpop.f32.mrf.mxu0
    %v304 = vadd.f32 0.0, %v303
    %305 = vmatmul.f32.gmra.mxu0 %v45
    %v306 = vpop.f32.mrf.mxu0
    %v307 = vadd.f32 0.0, %v306
    %308 = vmatmul.f32.gmra.mxu0 %v46
    %v309 = vpop.f32.mrf.mxu0
    %v310 = vadd.f32 0.0, %v309
    %311 = vmatmul.f32.gmra.mxu0 %v47
    %v312 = vpop.f32.mrf.mxu0
    %v313 = vadd.f32 0.0, %v312
    %314 = vmatmul.f32.gmra.mxu0 %v48
    %v315 = vpop.f32.mrf.mxu0
    %v316 = vadd.f32 0.0, %v315
    %317 = vmatmul.f32.gmra.mxu0 %v49
    %v318 = vpop.f32.mrf.mxu0
    %v319 = vadd.f32 0.0, %v318
    %320 = vmatmul.f32.gmra.mxu0 %v50
    %v321 = vpop.f32.mrf.mxu0
    %v322 = vadd.f32 0.0, %v321
    %323 = vmatmul.f32.gmra.mxu0 %v51
    %v324 = vpop.f32.mrf.mxu0
    %v325 = vadd.f32 0.0, %v324
    %326 = vmatmul.f32.gmra.mxu0 %v52
    %v327 = vpop.f32.mrf.mxu0
    %v328 = vadd.f32 0.0, %v327
    %329 = vmatmul.f32.gmra.mxu0 %v53
    %v330 = vpop.f32.mrf.mxu0
    %v331 = vadd.f32 0.0, %v330
    %332 = vmatmul.f32.gmra.mxu0 %v54
    %v333 = vpop.f32.mrf.mxu0
    %v334 = vadd.f32 0.0, %v333
    %335 = vmatmul.f32.gmra.mxu0 %v55
    %v336 = vpop.f32.mrf.mxu0
    %v337 = vadd.f32 0.0, %v336
    %338 = vmatmul.f32.gmra.mxu0 %v56
    %v339 = vpop.f32.mrf.mxu0
    %v340 = vadd.f32 0.0, %v339
    %341 = vmatmul.f32.gmra.mxu0 %v57
    %v342 = vpop.f32.mrf.mxu0
    %v343 = vadd.f32 0.0, %v342
    %344 = vmatmul.f32.gmra.mxu0 %v58
    %v345 = vpop.f32.mrf.mxu0
    %v346 = vadd.f32 0.0, %v345
    %347 = vmatmul.f32.gmra.mxu0 %v59
    %v348 = vpop.f32.mrf.mxu0
    %v349 = vadd.f32 0.0, %v348
    %350 = vdwg.mxu0
    %v351 = vmul.f32 %v304, 0.31666666
    %v352 = vmul.f32 %v307, 0.31666666
    %v353 = vmul.f32 %v310, 0.31666666
    %v354 = vmul.f32 %v313, 0.31666666
    %v355 = vmul.f32 %v316, 0.31666666
    %v356 = vmul.f32 %v319, 0.31666666
    %v357 = vmul.f32 %v322, 0.31666666
    %v358 = vmul.f32 %v325, 0.31666666
    %v359 = vmul.f32 %v328, 0.31666666
    %v360 = vmul.f32 %v331, 0.31666666
    %v361 = vmul.f32 %v334, 0.31666666
    %v362 = vmul.f32 %v337, 0.31666666
    %v363 = vmul.f32 %v340, 0.31666666
    %v364 = vmul.f32 %v343, 0.31666666
    %v365 = vmul.f32 %v346, 0.31666666
    %v366 = vmul.f32 %v349, 0.31666666
    %v367 = vadd.f32 %v270, %v351
    %v368 = vadd.f32 %v271, %v352
    %v369 = vadd.f32 %v272, %v353
    %v370 = vadd.f32 %v273, %v354
    %v371 = vadd.f32 %v274, %v355
    %v372 = vadd.f32 %v275, %v356
    %v373 = vadd.f32 %v276, %v357
    %v374 = vadd.f32 %v277, %v358
    %v375 = vadd.f32 %v278, %v359
    %v376 = vadd.f32 %v279, %v360
    %v377 = vadd.f32 %v280, %v361
    %v378 = vadd.f32 %v281, %v362
    %v379 = vadd.f32 %v282, %v363
    %v380 = vadd.f32 %v283, %v364
    %v381 = vadd.f32 %v284, %v365
    %v382 = vadd.f32 %v285, %v366
    %383 = vst [vmem:[#allocation7] sm:$0xff] %v367
    %384 = vst [vmem:[#allocation7 + $0x8] sm:$0xff] %v368
    %385 = vst [vmem:[#allocation7 + $0x10] sm:$0xff] %v369
    %386 = vst [vmem:[#allocation7 + $0x18] sm:$0xff] %v370
    %387 = vst [vmem:[#allocation7 + $0x20] sm:$0xff] %v371
    %388 = vst [vmem:[#allocation7 + $0x28] sm:$0xff] %v372
    %389 = vst [vmem:[#allocation7 + $0x30] sm:$0xff] %v373
    %390 = vst [vmem:[#allocation7 + $0x38] sm:$0xff] %v374
    %391 = vst [vmem:[#allocation7 + $0x40] sm:$0xff] %v375
    %392 = vst [vmem:[#allocation7 + $0x48] sm:$0xff] %v376
    %393 = vst [vmem:[#allocation7 + $0x50] sm:$0xff] %v377
    %394 = vst [vmem:[#allocation7 + $0x58] sm:$0xff] %v378
    %395 = vst [vmem:[#allocation7 + $0x60] sm:$0xff] %v379
    %396 = vst [vmem:[#allocation7 + $0x68] sm:$0xff] %v380
    %397 = vst [vmem:[#allocation7 + $0x70] sm:$0xff] %v381
    %398 = vst [vmem:[#allocation7 + $0x78] sm:$0xff] %v382
    // Predicated region
    $region18: #{tpu_custom_call.1} parent=1 // pred_check
      _
    $region19: #{tpu_custom_call.1} parent=1 // pred_check_branch
      %400 = sbr.rel (0) target = $region21
    $region20: #{tpu_custom_call.1} parent=1 // pred_region
      %402 = vsyncadd [#allocation4], 0
      %s403 = sshll.u32 [#allocation7], 4
      %s404 = int_to_ptr.vmem [resolvable:$true] %s403
      %s405 = sshll.u32 %s2, 4
      %s406 = int_to_ptr.hbm [resolvable:$true] %s405
      %411 = dma.vmem_to_hbm [thread:$0]  %s404, 2048, %s406, [#allocation4], 128, 128, 8
    $region21: #{tpu_custom_call.1} parent=1 // pred_fallthru
      _
    // Predicated region
    $region22: #{tpu_custom_call.1} parent=1 // pred_check
      _
    $region23: #{tpu_custom_call.1} parent=1 // pred_check_branch
      %413 = sbr.rel (0) target = $region25
    $region24: #{tpu_custom_call.1} parent=1 // pred_region
      %415 = dma.done [#allocation4], 2048
    $region25: #{tpu_custom_call.1} parent=1 // pred_fallthru
      _
    %416 = vsyncpa [#allocation3], 1
    %417 = vsyncpa [#allocation6], 1
    %418 = vsyncpa [#allocation4], 1

</llo_original>
